<compile_context>
chip_gen: v7x
topology: tpu7x:2x2x1
jax: 0.10.0
libtpu: 0.0.40
codegen_flags: <defaults>
</compile_context>

<pallas_src>
import jax
import jax.numpy as jnp
from jax.experimental import pallas as pl
from jax.experimental.pallas import tpu as pltpu


def _mish_kernel(x_ref, o_ref):
    x = x_ref[...].astype(jnp.float32)
    # tanh(softplus(x)) as a rational function of u = exp(-|x|):
    #   x >= 0: (1 + 2u)   / (1 + 2u + 2u^2)
    #   x <  0: (2u + u^2) / (2 + 2u + u^2)
    # Exact algebraic identity, overflow-free, single transcendental.
    # Written as (c - s) / (c + s) to use one select instead of two.
    u = jnp.exp(-jnp.abs(x))
    u2 = u * u
    c = 1.0 + 2.0 * u + u2
    s = jnp.where(x >= 0.0, u2, 1.0)
    o_ref[...] = (x * ((c - s) / (c + s))).astype(o_ref.dtype)


_LANE_CANDIDATES = (4096, 2048, 1024, 512, 256, 128)
_MIN_GRID = 8  # enough steps for DMA/compute overlap + v7x megacore sharding


def _cdiv(a, b):
    return -(-a // b)


def _round_up(a, m):
    return _cdiv(a, m) * m


def _vmem_budget_bytes():
    """Scoped-VMEM bytes we request: safe on v5e/v6e (128 MiB) and v7x (64 MiB)."""
    try:
        cap = pltpu.get_tpu_info().vmem_capacity_bytes
    except Exception:
        cap = 64 << 20  # assume the smallest (v7x per-TC) physical VMEM
    return min(32 << 20, cap // 2)


def _choose_lane(n, sub_mult):
    """Widest lane-dense width that divides n and still leaves rows to split."""
    for c in _LANE_CANDIDATES:
        if n % c == 0 and (n // c) >= sub_mult * _MIN_GRID:
            return c
    for c in _LANE_CANDIDATES:
        if n % c == 0:
            return c
    return None


def _plan_tiles(rows, lane, itemsize, sub_mult, target_block_bytes):
    """Pick (row_tile, grid) with >= _MIN_GRID balanced steps when splittable."""
    if rows <= sub_mult:
        return rows, 1  # tiny tensor: one full-extent block, nothing to split
    rt = max(sub_mult,
             (target_block_bytes // (lane * itemsize)) // sub_mult * sub_mult)
    grid = _cdiv(rows, rt)
    max_grid = max(1, rows // sub_mult)          # every tile >= sub_mult rows
    grid = min(max(grid, _MIN_GRID), max_grid)   # never a 1-step pipeline
    if grid > 1 and grid % 2:
        grid = min(grid + 1, max_grid)           # even grid balances v7x TCs
    rt = _round_up(_cdiv(rows, grid), sub_mult)  # rebalance: no straggler sliver
    grid = _cdiv(rows, rt)
    return rt, grid


def mish_auto(x: jax.Array, *, target_block_bytes: int = 4 << 20) -> jax.Array:
    """Elementwise Mish: y = x * tanh(softplus(x)). Any shape, float dtypes."""
    orig_shape = x.shape
    dtype = x.dtype
    itemsize = jnp.dtype(dtype).itemsize
    # Sublane packing multiple: 8 for 4-byte, 16 for 2-byte, 32 for 1-byte.
    sub_mult = {4: 8, 2: 16, 1: 32}.get(itemsize, 8)

    flat = x.reshape(-1)
    n = flat.shape[0]
    if n == 0:
        return x

    lane = _choose_lane(n, sub_mult)
    if lane is None:
        # Misaligned fallback: pad only to the next multiple of 1024 (8x128)
        # so stores stay wide and unmasked.
        # TODO(synk): replace pad + final slice with a masked-tail store to
        # drop the extra HBM copies for misaligned sizes.
        lane = 1024
        n_pad = _round_up(n, lane)
        flat = jnp.pad(flat, (0, n_pad - n))
    else:
        n_pad = n

    rows = n_pad // lane
    x2d = flat.reshape(rows, lane)

    budget = _vmem_budget_bytes()
    # 2 arrays (in + out) x 2 pipeline buffers per block, plus headroom.
    target = min(target_block_bytes, budget // 5)
    rt, grid = _plan_tiles(rows, lane, itemsize, sub_mult, target)
    # NOTE: a pipeline_mode=pl.Buffered(3) sweep on the input spec is a
    # candidate few-% experiment once grid > 2; left at the default 2-deep
    # buffering here (verify with xprof before committing).

    out2d = pl.pallas_call(
        _mish_kernel,
        out_shape=jax.ShapeDtypeStruct((rows, lane), dtype),
        grid_spec=pltpu.PrefetchScalarGridSpec(
            num_scalar_prefetch=0,
            grid=(grid,),
            in_specs=[pl.BlockSpec((rt, lane), lambda i: (i, 0))],
            out_specs=pl.BlockSpec((rt, lane), lambda i: (i, 0)),
        ),
        compiler_params=pltpu.CompilerParams(
            dimension_semantics=("parallel",),
            vmem_limit_bytes=budget,
        ),
    )(x2d)

    out = out2d.reshape(-1)
    if n_pad != n:
        out = out[:n]
    return out.reshape(orig_shape)


def mish_ref(x):
    xf = x.astype(jnp.float32)
    return (xf * jnp.tanh(jax.nn.softplus(xf))).astype(x.dtype)


if __name__ == "__main__":
    key = jax.random.PRNGKey(0)

    # Primary test: NCHW input, batch=2, channels=4, spatial=16x16 (f32).
    x = jax.random.normal(key, (2, 4, 16, 16), dtype=jnp.float32) * 3.0
    y = mish_auto(x)
    jax.block_until_ready(y)
    assert y.shape == x.shape and y.dtype == x.dtype
    assert jnp.allclose(y, mish_ref(x), atol=1e-5, rtol=1e-5), \
        "mismatch vs reference (f32, aligned)"

    # Multi-block path: larger tensor exercises the pipelined (grid > 1) path.
    x_big = jax.random.normal(jax.random.PRNGKey(2), (4, 8, 64, 64),
                              dtype=jnp.float32) * 3.0
    y_big = mish_auto(x_big)
    jax.block_until_ready(y_big)
    assert jnp.allclose(y_big, mish_ref(x_big), atol=1e-5, rtol=1e-5), \
        "mismatch vs reference (f32, multi-block)"

    # Misaligned path: odd, non-128-divisible size exercises the pad fallback.
    x_odd = jax.random.normal(jax.random.PRNGKey(1), (3, 5, 7, 11),
                              dtype=jnp.float32) * 3.0
    y_odd = mish_auto(x_odd)
    jax.block_until_ready(y_odd)
    assert jnp.allclose(y_odd, mish_ref(x_odd), atol=1e-5, rtol=1e-5), \
        "mismatch vs reference (f32, misaligned)"

    # bf16 path (sublane packing multiple 16).
    x_bf = (jax.random.normal(jax.random.PRNGKey(3), (2, 4, 16, 16),
                              dtype=jnp.float32) * 3.0).astype(jnp.bfloat16)
    y_bf = mish_auto(x_bf)
    jax.block_until_ready(y_bf)
    assert jnp.allclose(y_bf.astype(jnp.float32),
                        mish_ref(x_bf).astype(jnp.float32),
                        atol=2e-2, rtol=2e-2), "mismatch vs reference (bf16)"

    print("KERNEL_OK")
</pallas_src>

<mosaic_0001>
module attributes {stable_mosaic.version = 11 : i64} {
  func.func @_mish_kernel(%arg0: i32, %arg1: memref<1x2048xf32, #tpu.memory_space<vmem>>, %arg2: memref<1x2048xf32, #tpu.memory_space<vmem>>) attributes {dimension_semantics = [#tpu.dimension_semantics<parallel>], iteration_bounds = array<i64: 1>, scalar_prefetch = 0 : i64, scratch_operands = 0 : i64, tpu.core_type = #tpu.core_type<tc>, window_params = [{transform_indices = @transform_0, window_bounds = array<i64: 1, 2048>}, {transform_indices = @transform_1, window_bounds = array<i64: 1, 2048>}]} {
    %c0 = arith.constant 0 : index
    %c0_0 = arith.constant 0 : index
    %0 = vector.load %arg1[%c0, %c0_0] : memref<1x2048xf32, #tpu.memory_space<vmem>>, vector<1x2048xf32>
    %1 = math.absf %0 : vector<1x2048xf32>
    %cst = arith.constant 0.000000e+00 : f32
    %2 = vector.broadcast %cst : f32 to vector<1x2048xf32>
    %3 = arith.subf %2, %1 : vector<1x2048xf32>
    %4 = math.exp %3 : vector<1x2048xf32>
    %5 = arith.mulf %4, %4 : vector<1x2048xf32>
    %cst_1 = arith.constant 2.000000e+00 : f32
    %6 = vector.broadcast %cst_1 : f32 to vector<1x2048xf32>
    %7 = arith.mulf %6, %4 : vector<1x2048xf32>
    %cst_2 = arith.constant 1.000000e+00 : f32
    %8 = vector.broadcast %cst_2 : f32 to vector<1x2048xf32>
    %9 = arith.addf %8, %7 : vector<1x2048xf32>
    %10 = arith.addf %9, %5 : vector<1x2048xf32>
    %cst_3 = arith.constant 0.000000e+00 : f32
    %11 = vector.broadcast %cst_3 : f32 to vector<1x2048xf32>
    %12 = arith.cmpf oge, %0, %11 : vector<1x2048xf32>
    %cst_4 = arith.constant 1.000000e+00 : f32
    %13 = vector.broadcast %cst_4 : f32 to vector<1x2048xf32>
    %14 = arith.select %12, %5, %13 : vector<1x2048xi1>, vector<1x2048xf32>
    %15 = arith.subf %10, %14 : vector<1x2048xf32>
    %16 = arith.addf %10, %14 : vector<1x2048xf32>
    %17 = arith.divf %15, %16 : vector<1x2048xf32>
    %18 = arith.mulf %0, %17 : vector<1x2048xf32>
    %c0_5 = arith.constant 0 : index
    %c0_6 = arith.constant 0 : index
    %19 = vector.load %arg2[%c0_5, %c0_6] : memref<1x2048xf32, #tpu.memory_space<vmem>>, vector<1x2048xf32>
    tpu.vector_store %arg2[%c0_5, %c0_6], %18 {strides = array<i32>} : memref<1x2048xf32, #tpu.memory_space<vmem>>, vector<1x2048xf32>,
    return
  }
  func.func @transform_0(%arg0: i32) -> (i32, i32) {
    %c0_i32 = arith.constant 0 : i32
    %c0_i32_0 = arith.constant 0 : i32
    return %arg0, %c0_i32 : i32, i32
  }
  func.func @transform_1(%arg0: i32) -> (i32, i32) {
    %c0_i32 = arith.constant 0 : i32
    %c0_i32_0 = arith.constant 0 : i32
    return %arg0, %c0_i32 : i32, i32
  }
}

</mosaic_0001>

<llo_original>
// kernel: tpu_custom_call.1
$region0: #{tpu_custom_call.1}
  #allocation0 [shape = 'u32[]', space=smem, size = 0x4, offset = 0x4, fixed_abs, tag = 'smem constant byte address 0x4 - core index']
  #allocation1 [shape = 'u32[144,128]{1,0:T(1,128)}', space=vmem, size = 0x12000, scoped, tag = 'internal scratch']
  %s0 = inlined_call_operand.hbm [shape: f32[1,2048], index: 0, kind: input, shape index: {}]
  %s1 = inlined_call_operand.hbm [shape: f32[1,2048], index: 1, kind: output, shape index: {}]
  %s2 = sld [smem:[#allocation0]]
  $region18: #{tpu_custom_call.1} parent=0
    _
  %s4 = ssub.s32 1, %s2
  %s5 = scalar_select 0, %s4, %s2
  $region1: #{tpu_custom_call.1} parent=0
    #allocation2 [shape = 'u8[8192]{0}', space=vmem, size = 0x2000, scoped, tag = 'input window, operand 0, single buffered']
    #allocation3 [shape = 's32[1]{0}', space=sflag, size = 0x4, scoped, tag = 'scoped memory for tpu_custom_call.1']
    #allocation4 [shape = 's32[1]{0}', space=sflag, size = 0x4, scoped, tag = 'scoped memory for tpu_custom_call.1']
    #allocation5 [shape = 'u8[8192]{0}', space=vmem, size = 0x2000, scoped, tag = 'output window, operand 0, single buffered']
    %6 = vsyncpa [#allocation3], 0
    %7 = vsyncpa [#allocation4], 0
    // Predicated region
    $region2: #{tpu_custom_call.1} parent=1 // pred_check
      _
    $region3: #{tpu_custom_call.1} parent=1 // pred_check_branch
      %9 = sbr.rel (0) target = $region5
    $region4: #{tpu_custom_call.1} parent=1 // pred_region
      %s11 = ssub.s32 256, 256
      %12 = vsyncadd [#allocation3], %s11
      %s14 = sshll.u32 [#allocation2], 4
      %s15 = int_to_ptr.vmem [resolvable:$true] %s14
      %17 = dma.hbm_to_vmem [thread:$0]  %s0, 256, %s15, [#allocation3]
    $region5: #{tpu_custom_call.1} parent=1 // pred_fallthru
      _
    // Predicated region
    $region6: #{tpu_custom_call.1} parent=1 // pred_check
      _
    $region7: #{tpu_custom_call.1} parent=1 // pred_check_branch
      %19 = sbr.rel (0) target = $region9
    $region8: #{tpu_custom_call.1} parent=1 // pred_region
      %20 = dma.done [#allocation3], 256
    $region9: #{tpu_custom_call.1} parent=1 // pred_fallthru
      _
    %v21 = vld [vmem:[#allocation2] sm:$0xff]
    %v22 = vld [vmem:[#allocation2 + $0x8] sm:$0xff]
    %v23 = vand.u32 2147483647, %v21
    %v24 = vand.u32 2147483647, %v22
    %v25 = vsub.f32 0.0, %v23
    %v26 = vsub.f32 0.0, %v24
    %v27 = vmul.f32 %v25, 1.442695
    %v28 = vpow.pop %v27
    %v29 = vmul.f32 %v26, 1.442695
    %v30 = vpow.pop %v29
    %v31 = vmul.f32 %v28, %v28
    %v32 = vmul.f32 %v30, %v30
    %v33 = vmul.f32 %v28, 2.0
    %v34 = vmul.f32 %v30, 2.0
    %v35 = vadd.f32 %v33, 1.0
    %v36 = vadd.f32 %v34, 1.0
    %v37 = vadd.f32 %v35, %v31
    %v38 = vadd.f32 %v36, %v32
    %vm39 = vcmp.ge.f32.partialorder %v21, 0.0
    %vm40 = vcmp.ge.f32.partialorder %v22, 0.0
    %v41 = vsel %vm39, %v31, 1.0
    %v42 = vsel %vm40, %v32, 1.0
    %v43 = vsub.f32 %v37, %v41
    %v44 = vsub.f32 %v38, %v42
    %v45 = vadd.f32 %v37, %v41
    %v46 = vadd.f32 %v38, %v42
    %v47 = vrcp.pop %v45
    %v48 = vmul.f32 %v43, %v47
    %v49 = vrcp.pop %v46
    %v50 = vmul.f32 %v44, %v49
    %v51 = vmul.f32 %v21, %v48
    %v52 = vmul.f32 %v22, %v50
    %53 = vst [vmem:[#allocation5] sm:$0xff] %v51
    %54 = vst [vmem:[#allocation5 + $0x8] sm:$0xff] %v52
    // Predicated region
    $region10: #{tpu_custom_call.1} parent=1 // pred_check
      _
    $region11: #{tpu_custom_call.1} parent=1 // pred_check_branch
      %56 = sbr.rel (0) target = $region13
    $region12: #{tpu_custom_call.1} parent=1 // pred_region
      %s58 = ssub.s32 256, 256
      %59 = vsyncadd [#allocation4], %s58
      %s61 = sshll.u32 [#allocation5], 4
      %s62 = int_to_ptr.vmem [resolvable:$true] %s61
      %64 = dma.vmem_to_hbm [thread:$0]  %s62, 256, %s1, [#allocation4]
    $region13: #{tpu_custom_call.1} parent=1 // pred_fallthru
      _
    // Predicated region
    $region14: #{tpu_custom_call.1} parent=1 // pred_check
      _
    $region15: #{tpu_custom_call.1} parent=1 // pred_check_branch
      %66 = sbr.rel (0) target = $region17
    $region16: #{tpu_custom_call.1} parent=1 // pred_region
      %67 = dma.done [#allocation4], 256
    $region17: #{tpu_custom_call.1} parent=1 // pred_fallthru
      _
    %68 = vsyncpa [#allocation3], 1
    %69 = vsyncpa [#allocation4], 1

</llo_original>
